<compile_context>
chip_gen: v5e
topology: v5e:2x2
jax: 0.10.0
libtpu: 0.0.40
codegen_flags: <defaults>
</compile_context>

<pallas_src>
import jax
import jax.numpy as jnp
from jax.experimental import pallas as pl
from jax.experimental.pallas import tpu as pltpu


# Padded tile sizes (TPU vreg-friendly, minimal for this problem).
PAD_M = 8      # padded output rows (f32 sublane count)
PAD_K = 8      # padded weight-slab rows (3 W^T rows + 1 bias row + padding)
PAD_N = 128    # padded out_features (lane-dense output)

IN_FEATURES = 3
OUT_FEATURES = 3


def linear_relu_kernel(x_ref, wt_ref, o_ref):
    # x_ref : SMEM (1, 3) f32   -- activation, read as scalars
    # wt_ref: VMEM (PAD_K, PAD_N) f32
    #         rows 0..2 = W^T rows (padded), row 3 = bias (padded), rest zero
    # o_ref : VMEM (PAD_M, PAD_N) f32
    #
    # VPU unroll over K=3: scalar-broadcast multiply-accumulate against one
    # (1, 128) weight row per step; bias comes in "for free" as the initial
    # accumulator (augmented-matrix trick).
    acc = wt_ref[IN_FEATURES:IN_FEATURES + 1, :]          # bias row, (1, 128)
    acc = acc + x_ref[0, 0] * wt_ref[0:1, :]
    acc = acc + x_ref[0, 1] * wt_ref[1:2, :]
    acc = acc + x_ref[0, 2] * wt_ref[2:3, :]
    acc = jnp.maximum(acc, 0.0)
    # One full (8, 128) vreg store (unmasked); rows 1..7 are don't-care copies.
    o_ref[...] = jnp.broadcast_to(acc, o_ref.shape)


def prepare_params(weight, bias):
    """Build the augmented, padded W^T slab once (outside the call path).

    weight: (out_features, in_features) f32  (PyTorch nn.Linear layout)
    bias:   (out_features,)             f32
    """
    k_out, k_in = weight.shape
    wt_aug = jnp.zeros((PAD_K, PAD_N), jnp.float32)
    wt_aug = wt_aug.at[:k_in, :k_out].set(weight.T)   # rows 0..k_in-1: W^T
    wt_aug = wt_aug.at[k_in, :k_out].set(bias)        # row  k_in    : bias
    return wt_aug


def linear_relu(x, wt_aug, out_features):
    """x: (1, in_features) f32; wt_aug: precomputed augmented weight slab."""
    n, k_in = x.shape
    assert n == 1 and k_in == IN_FEATURES, "kernel is specialized to x of shape (1, 3)"

    out_pad = pl.pallas_call(
        linear_relu_kernel,
        out_shape=jax.ShapeDtypeStruct((PAD_M, PAD_N), jnp.float32),
        in_specs=[
            pl.BlockSpec(memory_space=pltpu.MemorySpace.SMEM),   # x, natural shape
            pl.BlockSpec(memory_space=pltpu.MemorySpace.VMEM),   # augmented W^T
        ],
        out_specs=pl.BlockSpec(memory_space=pltpu.MemorySpace.VMEM),
    )(x, wt_aug)

    # Only remaining wrapper op: carve the valid (1, out_features) window out
    # of the lane-dense slab to match the module's output shape.
    return out_pad[:n, :out_features]


if __name__ == "__main__":
    key = jax.random.PRNGKey(0)
    k_x, k_w, k_b = jax.random.split(key, 3)

    in_features, out_features = IN_FEATURES, OUT_FEATURES

    # Deterministic parameter init (mimic nn.Linear uniform(-1/sqrt(fan_in), ...)).
    bound = 1.0 / jnp.sqrt(jnp.float32(in_features))
    weight = jax.random.uniform(
        k_w, (out_features, in_features), jnp.float32, -bound, bound)
    bias = jax.random.uniform(
        k_b, (out_features,), jnp.float32, -bound, bound)

    # Input consistent with the module: x1 = torch.randn(1, 3)
    x1 = jax.random.normal(k_x, (1, in_features), jnp.float32)

    # Parameter padding/augmentation hoisted out of the call path (done once).
    wt_aug = prepare_params(weight, bias)

    out = linear_relu(x1, wt_aug, out_features)
    out = jax.block_until_ready(out)

    # Reference check in plain JAX.
    ref = jnp.maximum(x1 @ weight.T + bias, 0.0)
    assert out.shape == (1, out_features)
    assert jnp.allclose(out, ref, atol=1e-5, rtol=1e-5)

    print("KERNEL_OK")
</pallas_src>

<mosaic_0001>
module attributes {stable_mosaic.version = 11 : i64} {
  func.func @linear_relu_kernel(%arg0: memref<1x3xf32, #tpu.memory_space<smem>>, %arg1: memref<8x128xf32, #tpu.memory_space<vmem>>, %arg2: memref<8x128xf32, #tpu.memory_space<vmem>>) attributes {dimension_semantics = [], scalar_prefetch = 0 : i64, scratch_operands = 0 : i64, tpu.core_type = #tpu.core_type<tc>} {
    %c3 = arith.constant 3 : index
    %c0 = arith.constant 0 : index
    %0 = vector.load %arg1[%c3, %c0] : memref<8x128xf32, #tpu.memory_space<vmem>>, vector<1x128xf32>
    %c0_0 = arith.constant 0 : index
    %c0_1 = arith.constant 0 : index
    %1 = memref.load %arg0[%c0_0, %c0_1] : memref<1x3xf32, #tpu.memory_space<smem>>
    %c0_2 = arith.constant 0 : index
    %c0_3 = arith.constant 0 : index
    %2 = vector.load %arg1[%c0_2, %c0_3] : memref<8x128xf32, #tpu.memory_space<vmem>>, vector<1x128xf32>
    %3 = vector.broadcast %1 : f32 to vector<1x128xf32>
    %4 = arith.mulf %3, %2 : vector<1x128xf32>
    %5 = arith.addf %0, %4 : vector<1x128xf32>
    %c0_4 = arith.constant 0 : index
    %c1 = arith.constant 1 : index
    %6 = memref.load %arg0[%c0_4, %c1] : memref<1x3xf32, #tpu.memory_space<smem>>
    %c1_5 = arith.constant 1 : index
    %c0_6 = arith.constant 0 : index
    %7 = vector.load %arg1[%c1_5, %c0_6] : memref<8x128xf32, #tpu.memory_space<vmem>>, vector<1x128xf32>
    %8 = vector.broadcast %6 : f32 to vector<1x128xf32>
    %9 = arith.mulf %8, %7 : vector<1x128xf32>
    %10 = arith.addf %5, %9 : vector<1x128xf32>
    %c0_7 = arith.constant 0 : index
    %c2 = arith.constant 2 : index
    %11 = memref.load %arg0[%c0_7, %c2] : memref<1x3xf32, #tpu.memory_space<smem>>
    %c2_8 = arith.constant 2 : index
    %c0_9 = arith.constant 0 : index
    %12 = vector.load %arg1[%c2_8, %c0_9] : memref<8x128xf32, #tpu.memory_space<vmem>>, vector<1x128xf32>
    %13 = vector.broadcast %11 : f32 to vector<1x128xf32>
    %14 = arith.mulf %13, %12 : vector<1x128xf32>
    %15 = arith.addf %10, %14 : vector<1x128xf32>
    %cst = arith.constant 0.000000e+00 : f32
    %16 = vector.broadcast %cst : f32 to vector<1x128xf32>
    %17 = arith.maximumf %15, %16 : vector<1x128xf32>
    %18 = vector.shape_cast %17 : vector<1x128xf32> to vector<1x128xf32>
    %19 = vector.broadcast %18 : vector<1x128xf32> to vector<8x128xf32>
    %c0_10 = arith.constant 0 : index
    %c0_11 = arith.constant 0 : index
    %20 = vector.load %arg2[%c0_10, %c0_11] : memref<8x128xf32, #tpu.memory_space<vmem>>, vector<8x128xf32>
    tpu.vector_store %arg2[%c0_10, %c0_11], %19 {strides = array<i32>} : memref<8x128xf32, #tpu.memory_space<vmem>>, vector<8x128xf32>,
    return
  }
}

</mosaic_0001>

<llo_original>
// kernel: tpu_custom_call.1
$region0: #{tpu_custom_call.1}
  #allocation0 [shape = 'u32[]', space=smem, size = 0x4, offset = 0x4, fixed_abs, tag = 'smem constant byte address 0x4 - core index']
  #allocation1 [shape = 'u32[72,128]{1,0:T(1,128)}', space=vmem, size = 0x9000, scoped, tag = 'internal scratch']
  %s0 = inlined_call_operand.hbm [shape: f32[1,3], index: 0, kind: input, shape index: {}]
  %s1 = inlined_call_operand.hbm [shape: f32[8,128], index: 1, kind: input, shape index: {}]
  %s2 = inlined_call_operand.hbm [shape: f32[8,128], index: 2, kind: output, shape index: {}]
  %s3 = sld [smem:[#allocation0]]
  $region26: #{tpu_custom_call.1} parent=0
    _
  %s5 = ssub.s32 1, %s3
  %s6 = scalar_select 0, %s5, %s3
  $region1: #{tpu_custom_call.1} parent=0
    #allocation2 [shape = 'u8[512]{0}', space=smem, size = 0x200, scoped, tag = 'input window, operand 0, single buffered']
    #allocation3 [shape = 's32[1]{0}', space=sflag, size = 0x4, scoped, tag = 'scoped memory for tpu_custom_call.1']
    #allocation4 [shape = 's32[1]{0}', space=sflag, size = 0x4, scoped, tag = 'scoped memory for tpu_custom_call.1']
    #allocation5 [shape = 's32[1]{0}', space=sflag, size = 0x4, scoped, tag = 'scoped memory for tpu_custom_call.1']
    #allocation6 [shape = 'u8[4096]{0}', space=vmem, size = 0x1000, scoped, tag = 'input window, operand 1, single buffered']
    #allocation7 [shape = 'u8[4096]{0}', space=vmem, size = 0x1000, scoped, tag = 'output window, operand 0, single buffered']
    %7 = vsyncpa [#allocation5], 0
    %8 = vsyncpa [#allocation3], 0
    %9 = vsyncpa [#allocation4], 0
    // Predicated region
    $region2: #{tpu_custom_call.1} parent=1 // pred_check
      _
    $region3: #{tpu_custom_call.1} parent=1 // pred_check_branch
      %11 = sbr.rel (0) target = $region5
    $region4: #{tpu_custom_call.1} parent=1 // pred_region
      %13 = vsyncadd [#allocation5], 0
      %s15 = sshll.u32 %s0, 4
      %s16 = int_to_ptr.hbm [resolvable:$true] %s15
      %18 = dma.hbm_to_smem %s16, 16, [#allocation2], [#allocation5]
    $region5: #{tpu_custom_call.1} parent=1 // pred_fallthru
      _
    // Predicated region
    $region6: #{tpu_custom_call.1} parent=1 // pred_check
      _
    $region7: #{tpu_custom_call.1} parent=1 // pred_check_branch
      %20 = sbr.rel (0) target = $region9
    $region8: #{tpu_custom_call.1} parent=1 // pred_region
      %22 = vsyncadd [#allocation3], 0
      %s24 = sshll.u32 %s1, 4
      %s25 = int_to_ptr.hbm [resolvable:$true] %s24
      %s26 = sshll.u32 [#allocation6], 4
      %s27 = int_to_ptr.vmem [resolvable:$true] %s26
      %29 = dma.hbm_to_vmem [thread:$0]  %s25, 128, %s27, [#allocation3]
    $region9: #{tpu_custom_call.1} parent=1 // pred_fallthru
      _
    // Predicated region
    $region10: #{tpu_custom_call.1} parent=1 // pred_check
      _
    $region11: #{tpu_custom_call.1} parent=1 // pred_check_branch
      %31 = sbr.rel (0) target = $region13
    $region12: #{tpu_custom_call.1} parent=1 // pred_region
      %33 = dma.done [#allocation5], 16
    $region13: #{tpu_custom_call.1} parent=1 // pred_fallthru
      _
    // Predicated region
    $region14: #{tpu_custom_call.1} parent=1 // pred_check
      _
    $region15: #{tpu_custom_call.1} parent=1 // pred_check_branch
      %35 = sbr.rel (0) target = $region17
    $region16: #{tpu_custom_call.1} parent=1 // pred_region
      %37 = dma.done [#allocation3], 128
    $region17: #{tpu_custom_call.1} parent=1 // pred_fallthru
      _
    %38 = sfence
    %v39 = vld [vmem:[#allocation6 + $0x3] sm:$0x1]
    %s40 = sld [smem:[#allocation2]]
    %v41 = vld [vmem:[#allocation6] sm:$0x1]
    %v42 = vstv %s40
    %v43 = vmul.f32 %v42, %v41
    %v44 = vadd.f32 %v39, %v43
    %s45 = sld [smem:[#allocation2 + $0x1]]
    %v46 = vld [vmem:[#allocation6 + $0x1] sm:$0x1]
    %v47 = vstv %s45
    %v48 = vmul.f32 %v47, %v46
    %v49 = vadd.f32 %v44, %v48
    %s50 = sld [smem:[#allocation2 + $0x2]]
    %v51 = vld [vmem:[#allocation6 + $0x2] sm:$0x1]
    %v52 = vstv %s50
    %v53 = vmul.f32 %v52, %v51
    %v54 = vadd.f32 %v49, %v53
    %v55 = vmax.f32 %v54, 0.0
    %v56 = vperm.slane %v55, 0
    %57 = vst [vmem:[#allocation7] sm:$0xff] %v56
    // Predicated region
    $region18: #{tpu_custom_call.1} parent=1 // pred_check
      _
    $region19: #{tpu_custom_call.1} parent=1 // pred_check_branch
      %59 = sbr.rel (0) target = $region21
    $region20: #{tpu_custom_call.1} parent=1 // pred_region
      %61 = vsyncadd [#allocation4], 0
      %s63 = sshll.u32 [#allocation7], 4
      %s64 = int_to_ptr.vmem [resolvable:$true] %s63
      %s65 = sshll.u32 %s2, 4
      %s66 = int_to_ptr.hbm [resolvable:$true] %s65
      %68 = dma.vmem_to_hbm [thread:$0]  %s64, 128, %s66, [#allocation4]
    $region21: #{tpu_custom_call.1} parent=1 // pred_fallthru
      _
    // Predicated region
    $region22: #{tpu_custom_call.1} parent=1 // pred_check
      _
    $region23: #{tpu_custom_call.1} parent=1 // pred_check_branch
      %70 = sbr.rel (0) target = $region25
    $region24: #{tpu_custom_call.1} parent=1 // pred_region
      %72 = dma.done [#allocation4], 128
    $region25: #{tpu_custom_call.1} parent=1 // pred_fallthru
      _
    %73 = vsyncpa [#allocation3], 1
    %74 = vsyncpa [#allocation4], 1
    %75 = vsyncpa [#allocation5], 1

</llo_original>
